<compile_context>
chip_gen: v7x
topology: tpu7x:2x2x1
jax: 0.10.0
libtpu: 0.0.40
codegen_flags: <defaults>
</compile_context>

<pallas_src>
import functools

import jax
import jax.numpy as jnp
from jax.experimental import pallas as pl
from jax.experimental.pallas import tpu as pltpu


def _net_kernel(x_ref, w_ref, b_ref, o_ref):
    """Fused folded-linear + bias + softmax over the last dim.

    x_ref: [tile_b, n_in]   (f32)
    w_ref: [n_in,  n_out]   (f32, folded W1.T @ W2.T)
    b_ref: [1,     n_out]   (f32, folded b1 @ W2.T + b2)
    o_ref: [tile_b, n_out]  (f32 softmax probabilities)
    """
    # Single MXU matmul (the two Linear layers were folded in the wrapper).
    y = jnp.dot(x_ref[...], w_ref[...], preferred_element_type=jnp.float32)
    y = y + b_ref[...]                                  # VPU bias add
    # Numerically stable softmax over the (small, full-extent) last dim.
    y = y - jnp.max(y, axis=-1, keepdims=True)          # XLU reduce
    e = jnp.exp(y)                                      # EUP
    o_ref[...] = (e / jnp.sum(e, axis=-1, keepdims=True)).astype(o_ref.dtype)


def prepare_net_params(w1, b1, w2, b2):
    """Fold both Linear layers into one affine map. Run ONCE, outside the
    per-step path.

    PyTorch Linear layout: w1 [n_hidden, n_in], b1 [n_hidden],
    w2 [n_out, n_hidden], b2 [n_out].
    Returns (w_folded [n_in, n_out], b_folded [1, n_out]).
    """
    w1 = jnp.asarray(w1, jnp.float32)
    b1 = jnp.asarray(b1, jnp.float32)
    w2 = jnp.asarray(w2, jnp.float32)
    b2 = jnp.asarray(b2, jnp.float32)
    w = w1.T @ w2.T                        # [n_in, n_out]
    b = (b1 @ w2.T + b2).reshape(1, -1)    # [1, n_out]
    return w, b


def _tensorcore_count():
    """2 on v7x (2 TCs/chip), 1 on v5e/v6e. Conservative fallback: 1."""
    try:
        kind = jax.devices()[0].device_kind.lower()
    except Exception:  # pragma: no cover - defensive
        return 1
    return 2 if "v7" in kind else 1


@functools.partial(jax.jit, static_argnames=("tile_b",))
def _net_forward_impl(state, w_folded, b_folded, *, tile_b):
    B, n_in = state.shape
    n_out = w_folded.shape[1]
    grid = (B // tile_b,)
    return pl.pallas_call(
        _net_kernel,
        out_shape=jax.ShapeDtypeStruct((B, n_out), jnp.float32),
        grid=grid,
        in_specs=[
            pl.BlockSpec((tile_b, n_in), lambda i: (i, 0)),
            pl.BlockSpec((n_in, n_out), lambda i: (0, 0)),
            pl.BlockSpec((1, n_out), lambda i: (0, 0)),
        ],
        out_specs=pl.BlockSpec((tile_b, n_out), lambda i: (i, 0)),
        compiler_params=pltpu.CompilerParams(
            dimension_semantics=("parallel",)),
    )(state, w_folded, b_folded)


def net_forward(state, w_folded, b_folded):
    """state: [B, n_in] (f32) -> softmax probabilities [B, n_out] (f32)."""
    state = jnp.asarray(state, jnp.float32)
    B = state.shape[0]
    # Single full-batch block on 1-TC chips (grid splits there are a serial
    # loop = pure per-step overhead).  On 2-TC v7x, split the batch exactly
    # once so each TensorCore gets one block.
    tc = _tensorcore_count()
    tile_b = B
    if tc > 1 and B % tc == 0 and (B // tc) % 8 == 0:
        tile_b = B // tc
    return _net_forward_impl(state, w_folded, b_folded, tile_b=tile_b)


def _reference(state, w1, b1, w2, b2):
    h = state @ w1.T + b1
    y = h @ w2.T + b2
    y = y - jnp.max(y, axis=-1, keepdims=True)
    e = jnp.exp(y)
    return e / jnp.sum(e, axis=-1, keepdims=True)


if __name__ == "__main__":
    # Shapes consistent with the script (n_state = n_action = 10): Net maps
    # 10 -> 32 -> 10.  Small batches; B=16 exercises the v7x split path when
    # run on a 2-TC chip, B=4 exercises the single-block fallback.
    n_input, n_hidden, n_output = 10, 32, 10
    B, B_small = 16, 4

    key = jax.random.PRNGKey(0)
    k_x, k_w1, k_b1, k_w2, k_b2 = jax.random.split(key, 5)

    state = jax.random.normal(k_x, (B, n_input), dtype=jnp.float32)
    state_small = state[:B_small]
    # PyTorch Linear shapes: weight [out, in], bias [out].
    w1 = 0.35 * jax.random.normal(k_w1, (n_hidden, n_input), dtype=jnp.float32)
    b1 = 0.35 * jax.random.normal(k_b1, (n_hidden,), dtype=jnp.float32)
    w2 = 0.35 * jax.random.normal(k_w2, (n_output, n_hidden), dtype=jnp.float32)
    b2 = 0.35 * jax.random.normal(k_b2, (n_output,), dtype=jnp.float32)

    # One-time weight fold (hoisted out of the per-step path).
    wf, bf = prepare_net_params(w1, b1, w2, b2)

    out = jax.block_until_ready(net_forward(state, wf, bf))
    ref = _reference(state, w1, b1, w2, b2)
    assert out.shape == (B, n_output)
    assert jnp.allclose(out, ref, atol=1e-5, rtol=1e-5), "batched path mismatch"
    assert jnp.allclose(jnp.sum(out, axis=-1), 1.0, atol=1e-5), "row sums off"

    out_s = jax.block_until_ready(net_forward(state_small, wf, bf))
    ref_s = _reference(state_small, w1, b1, w2, b2)
    assert out_s.shape == (B_small, n_output)
    assert jnp.allclose(out_s, ref_s, atol=1e-5, rtol=1e-5), "small-batch mismatch"
    assert jnp.allclose(jnp.sum(out_s, axis=-1), 1.0, atol=1e-5), "row sums off"

    print("KERNEL_OK")
</pallas_src>

<mosaic_0001>
module attributes {stable_mosaic.version = 11 : i64} {
  func.func @_net_kernel(%arg0: i32, %arg1: memref<16x10xf32, #tpu.memory_space<vmem>>, %arg2: memref<10x10xf32, #tpu.memory_space<vmem>>, %arg3: memref<1x10xf32, #tpu.memory_space<vmem>>, %arg4: memref<16x10xf32, #tpu.memory_space<vmem>>) attributes {dimension_semantics = [#tpu.dimension_semantics<parallel>], iteration_bounds = array<i64: 1>, scalar_prefetch = 0 : i64, scratch_operands = 0 : i64, tpu.core_type = #tpu.core_type<tc>, window_params = [{transform_indices = @transform_0, window_bounds = array<i64: 16, 10>}, {pipeline_mode = #tpu.pipeline_mode<synchronous>, transform_indices = @transform_1, window_bounds = array<i64: 10, 10>}, {pipeline_mode = #tpu.pipeline_mode<synchronous>, transform_indices = @transform_2, window_bounds = array<i64: 1, 10>}, {transform_indices = @transform_3, window_bounds = array<i64: 16, 10>}]} {
    %c0 = arith.constant 0 : index
    %c0_0 = arith.constant 0 : index
    %0 = vector.load %arg1[%c0, %c0_0] : memref<16x10xf32, #tpu.memory_space<vmem>>, vector<16x10xf32>
    %c0_1 = arith.constant 0 : index
    %c0_2 = arith.constant 0 : index
    %1 = vector.load %arg2[%c0_1, %c0_2] : memref<10x10xf32, #tpu.memory_space<vmem>>, vector<10x10xf32>
    %cst = arith.constant dense<0.000000e+00> : vector<16x10xf32>
    %2 = tpu.matmul %0, %1, %cst {dimension_numbers = #tpu.dot_dimension_numbers<[1], [0], [0], [1], [0, 0, 1, 1], [], []>} : vector<16x10xf32>, vector<10x10xf32>, vector<16x10xf32> -> vector<16x10xf32>
    %c0_3 = arith.constant 0 : index
    %c0_4 = arith.constant 0 : index
    %3 = vector.load %arg3[%c0_3, %c0_4] : memref<1x10xf32, #tpu.memory_space<vmem>>, vector<1x10xf32>
    %4 = vector.broadcast %3 : vector<1x10xf32> to vector<16x10xf32>
    %5 = arith.addf %2, %4 : vector<16x10xf32>
    %cst_5 = arith.constant dense<0xFF800000> : vector<16xf32>
    %6 = vector.multi_reduction <maximumf>, %5, %cst_5 [1] : vector<16x10xf32> to vector<16xf32>
    %7 = vector.shape_cast %6 : vector<16xf32> to vector<16x1xf32>
    %8 = vector.broadcast %7 : vector<16x1xf32> to vector<16x10xf32>
    %9 = arith.subf %5, %8 : vector<16x10xf32>
    %10 = math.exp %9 : vector<16x10xf32>
    %cst_6 = arith.constant dense<0.000000e+00> : vector<16xf32>
    %11 = vector.multi_reduction <add>, %10, %cst_6 [1] : vector<16x10xf32> to vector<16xf32>
    %12 = vector.shape_cast %11 : vector<16xf32> to vector<16x1xf32>
    %13 = vector.broadcast %12 : vector<16x1xf32> to vector<16x10xf32>
    %14 = arith.divf %10, %13 : vector<16x10xf32>
    %c0_7 = arith.constant 0 : index
    %c0_8 = arith.constant 0 : index
    %15 = vector.load %arg4[%c0_7, %c0_8] : memref<16x10xf32, #tpu.memory_space<vmem>>, vector<16x10xf32>
    tpu.vector_store %arg4[%c0_7, %c0_8], %14 {strides = array<i32>} : memref<16x10xf32, #tpu.memory_space<vmem>>, vector<16x10xf32>,
    return
  }
  func.func @transform_0(%arg0: i32) -> (i32, i32) {
    %c0_i32 = arith.constant 0 : i32
    %c0_i32_0 = arith.constant 0 : i32
    return %arg0, %c0_i32 : i32, i32
  }
  func.func @transform_1(%arg0: i32) -> (i32, i32) {
    %c0_i32 = arith.constant 0 : i32
    %c0_i32_0 = arith.constant 0 : i32
    %c0_i32_1 = arith.constant 0 : i32
    return %c0_i32, %c0_i32_0 : i32, i32
  }
  func.func @transform_2(%arg0: i32) -> (i32, i32) {
    %c0_i32 = arith.constant 0 : i32
    %c0_i32_0 = arith.constant 0 : i32
    %c0_i32_1 = arith.constant 0 : i32
    return %c0_i32, %c0_i32_0 : i32, i32
  }
  func.func @transform_3(%arg0: i32) -> (i32, i32) {
    %c0_i32 = arith.constant 0 : i32
    %c0_i32_0 = arith.constant 0 : i32
    return %arg0, %c0_i32 : i32, i32
  }
}

</mosaic_0001>

<llo_original>
// kernel: _net_forward_impl.1
$region0: #{_net_forward_impl.1}
  #allocation0 [shape = 'u32[]', space=smem, size = 0x4, offset = 0x4, fixed_abs, tag = 'smem constant byte address 0x4 - core index']
  #allocation1 [shape = 'u32[144,128]{1,0:T(1,128)}', space=vmem, size = 0x12000, scoped, tag = 'internal scratch']
  %s0 = inlined_call_operand.hbm [shape: f32[16,10], index: 0, kind: input, shape index: {}]
  %s1 = inlined_call_operand.hbm [shape: f32[10,10], index: 1, kind: input, shape index: {}]
  %s2 = inlined_call_operand.vmem [shape: f32[1,10], index: 2, kind: input, shape index: {}]
  %s3 = inlined_call_operand.hbm [shape: f32[16,10], index: 3, kind: output, shape index: {}]
  %s4 = sld [smem:[#allocation0]]
  $region30: #{_net_forward_impl.1} parent=0
    _
  %s6 = ssub.s32 1, %s4
  %s7 = scalar_select 0, %s6, %s4
  $region1: #{_net_forward_impl.1} parent=0
    #allocation2 [shape = 'u8[8192]{0}', space=vmem, size = 0x2000, scoped, tag = 'input window, operand 0, single buffered']
    #allocation3 [shape = 's32[1]{0}', space=sflag, size = 0x4, scoped, tag = 'scoped memory for _net_forward_impl.1']
    #allocation4 [shape = 's32[1]{0}', space=sflag, size = 0x4, scoped, tag = 'scoped memory for _net_forward_impl.1']
    #allocation5 [shape = 'u8[8192]{0}', space=vmem, size = 0x2000, scoped, tag = 'input window, operand 1, single buffered']
    #allocation6 [shape = 's32[1]{0}', space=sflag, size = 0x4, scoped, tag = 'scoped memory for _net_forward_impl.1']
    #allocation7 [shape = 'u8[8192]{0}', space=vmem, size = 0x2000, scoped, tag = 'output window, operand 0, single buffered']
    %8 = vsyncpa [#allocation3], 0
    %9 = vsyncpa [#allocation6], 0
    %10 = vsyncpa [#allocation4], 0
    // Predicated region
    $region2: #{_net_forward_impl.1} parent=1 // pred_check
      _
    $region3: #{_net_forward_impl.1} parent=1 // pred_check_branch
      %12 = sbr.rel (0) target = $region5
    $region4: #{_net_forward_impl.1} parent=1 // pred_region
      %s14 = ssub.s32 256, 256
      %15 = vsyncadd [#allocation3], %s14
      %s16 = sshll.u32 [#allocation2], 4
      %s17 = int_to_ptr.vmem [resolvable:$true] %s16
      %22 = dma.hbm_to_vmem [thread:$0]  %s0, 256, %s17, [#allocation3], 128, 128, 8
    $region5: #{_net_forward_impl.1} parent=1 // pred_fallthru
      _
    // Predicated region
    $region6: #{_net_forward_impl.1} parent=1 // pred_check
      _
    $region7: #{_net_forward_impl.1} parent=1 // pred_check_branch
      %24 = sbr.rel (0) target = $region9
    $region8: #{_net_forward_impl.1} parent=1 // pred_region
      %s26 = ssub.s32 256, 256
      %27 = vsyncadd [#allocation6], %s26
      %s28 = sshll.u32 [#allocation5], 4
      %s29 = int_to_ptr.vmem [resolvable:$true] %s28
      %34 = dma.hbm_to_vmem [thread:$0]  %s1, 256, %s29, [#allocation6], 128, 128, 8
    $region9: #{_net_forward_impl.1} parent=1 // pred_fallthru
      _
    // Predicated region
    $region10: #{_net_forward_impl.1} parent=1 // pred_check
      _
    $region11: #{_net_forward_impl.1} parent=1 // pred_check_branch
      %36 = sbr.rel (0) target = $region13
    $region12: #{_net_forward_impl.1} parent=1 // pred_region
      _
    $region13: #{_net_forward_impl.1} parent=1 // pred_fallthru
      _
    // Predicated region
    $region14: #{_net_forward_impl.1} parent=1 // pred_check
      _
    $region15: #{_net_forward_impl.1} parent=1 // pred_check_branch
      %38 = sbr.rel (0) target = $region17
    $region16: #{_net_forward_impl.1} parent=1 // pred_region
      %39 = dma.done [#allocation3], 256
    $region17: #{_net_forward_impl.1} parent=1 // pred_fallthru
      _
    // Predicated region
    $region18: #{_net_forward_impl.1} parent=1 // pred_check
      _
    $region19: #{_net_forward_impl.1} parent=1 // pred_check_branch
      %41 = sbr.rel (0) target = $region21
    $region20: #{_net_forward_impl.1} parent=1 // pred_region
      %42 = dma.done [#allocation6], 256
    $region21: #{_net_forward_impl.1} parent=1 // pred_fallthru
      _
    %v43 = vld [vmem:[#allocation2] sm:$0xff]
    %v44 = vld [vmem:[#allocation2 + $0x8] sm:$0xff]
    %v45 = vld [vmem:[#allocation5] sm:$0xff]
    %v46 = vld [vmem:[#allocation5 + $0x8] sm:$0x3]
    %v47 = vld [vmem:[%s2] sm:$0x1]
    %v49 = vlaneseq
    %v50 = vshrl.u32 %v49, 7
    %v51 = vsub.s32 0, %v50
    %v52 = vrot.slane %v47, %v51
    %vm54 = vcmask 80896
    %v56 = vsel %vm54, %v43, 0
    %v59 = vsel %vm54, %v44, 0
    %vm61 = vcmask 1041408
    %v63 = vsel %vm61, %v46, 0
    %65 = vmatprep.subr.mxu0 0.0
    %66 = vmatpush1.msra.mxu0 %v45
    %67 = vmatprep.subr.mxu0 0.0
    %68 = vmatpush1.msra.mxu0 %v63
    %69 = vmatprep.subr.mxu0 0.0
    %70 = vmatpush1.msra.mxu0 0.0
    %71 = vmatprep.subr.mxu0 0.0
    %72 = vmatpush1.msra.mxu0 0.0
    %73 = vmatprep.subr.mxu0 0.0
    %74 = vmatpush1.msra.mxu0 0.0
    %75 = vmatprep.subr.mxu0 0.0
    %76 = vmatpush1.msra.mxu0 0.0
    %77 = vmatprep.subr.mxu0 0.0
    %78 = vmatpush1.msra.mxu0 0.0
    %79 = vmatprep.subr.mxu0 0.0
    %80 = vmatpush1.msra.mxu0 0.0
    %81 = vmatprep.subr.mxu0 0.0
    %82 = vmatpush1.msra.mxu0 0.0
    %83 = vmatprep.subr.mxu0 0.0
    %84 = vmatpush1.msra.mxu0 0.0
    %85 = vmatprep.subr.mxu0 0.0
    %86 = vmatpush1.msra.mxu0 0.0
    %87 = vmatprep.subr.mxu0 0.0
    %88 = vmatpush1.msra.mxu0 0.0
    %89 = vmatprep.subr.mxu0 0.0
    %90 = vmatpush1.msra.mxu0 0.0
    %91 = vmatprep.subr.mxu0 0.0
    %92 = vmatpush1.msra.mxu0 0.0
    %93 = vmatprep.subr.mxu0 0.0
    %94 = vmatpush1.msra.mxu0 0.0
    %95 = vmatprep.subr.mxu0 0.0
    %96 = vmatpush1.msra.mxu0 0.0
    %97 = vmatprep.subr.mxu0 0.0
    %98 = vmatpush1.msra.mxu0 0.0
    %99 = vmatprep.subr.mxu0 0.0
    %100 = vmatpush1.msra.mxu0 0.0
    %101 = vmatprep.subr.mxu0 0.0
    %102 = vmatpush1.msra.mxu0 0.0
    %103 = vmatprep.subr.mxu0 0.0
    %104 = vmatpush1.msra.mxu0 0.0
    %105 = vmatprep.subr.mxu0 0.0
    %106 = vmatpush1.msra.mxu0 0.0
    %107 = vmatprep.subr.mxu0 0.0
    %108 = vmatpush1.msra.mxu0 0.0
    %109 = vmatprep.subr.mxu0 0.0
    %110 = vmatpush1.msra.mxu0 0.0
    %111 = vmatprep.subr.mxu0 0.0
    %112 = vmatpush1.msra.mxu0 0.0
    %113 = vmatprep.subr.mxu0 0.0
    %114 = vmatpush1.msra.mxu0 0.0
    %115 = vmatprep.subr.mxu0 0.0
    %116 = vmatpush1.msra.mxu0 0.0
    %117 = vmatprep.subr.mxu0 0.0
    %118 = vmatpush1.msra.mxu0 0.0
    %119 = vmatprep.subr.mxu0 0.0
    %120 = vmatpush1.msra.mxu0 0.0
    %121 = vmatprep.subr.mxu0 0.0
    %122 = vmatpush1.msra.mxu0 0.0
    %123 = vmatprep.subr.mxu0 0.0
    %124 = vmatpush1.msra.mxu0 0.0
    %125 = vmatprep.subr.mxu0 0.0
    %126 = vmatpush1.msra.mxu0 0.0
    %127 = vmatprep.subr.mxu0 0.0
    %128 = vmatpush1.msra.mxu0 0.0
    %129 = vmatprep.mubr.f32.mxu0 0.0
    %130 = vmatmul.mubr.f32.gmra.mrb[0].mxu0 %v56
    %v131 = vpop.f32.mrb[0].mxu0
    %v132 = vadd.f32 %v52, %v131
    %v133 = vpop.f32.mrb[0].mxu0
    %134 = vmatprep.mubr.f32.mxu0 0.0
    %135 = vmatmul.mubr.f32.gmra.mrb[0].mxu0 %v59
    %v136 = vpop.f32.mrb[0].mxu0
    %v137 = vadd.f32 %v52, %v136
    %v138 = vpop.f32.mrb[0].mxu0
    %139 = vdwg.mxu0
    %v140 = vsel %vm54, %v132, -inf
    %141 = vmax.xlane.f32.xlu0 %v140
    %v142 = vpop.xlane.xlu0 %141
    %v143 = vsel %vm54, %v137, -inf
    %144 = vmax.xlane.f32.xlu0 %v143
    %v145 = vpop.xlane.xlu0 %144
    %v146 = vsub.f32 %v132, %v142
    %v147 = vsub.f32 %v137, %v145
    %v148 = vmul.f32 %v146, 1.442695
    %v149 = vpow.pop %v148
    %v150 = vmul.f32 %v147, 1.442695
    %v151 = vpow.pop %v150
    %v152 = vsel %vm54, %v149, 0.0
    %153 = vadd.xlane.f32.xlu0 %v152
    %v154 = vpop.xlane.xlu0 %153
    %v155 = vsel %vm54, %v151, 0.0
    %156 = vadd.xlane.f32.xlu0 %v155
    %v157 = vpop.xlane.xlu0 %156
    %v158 = vrcp.pop %v154
    %v159 = vmul.f32 %v149, %v158
    %v160 = vrcp.pop %v157
    %v161 = vmul.f32 %v151, %v160
    %162 = vst.msk [vmem:[#allocation7] sm:$0xff] %vm54, %v159
    %163 = vst.msk [vmem:[#allocation7 + $0x8] sm:$0xff] %vm54, %v161
    // Predicated region
    $region22: #{_net_forward_impl.1} parent=1 // pred_check
      _
    $region23: #{_net_forward_impl.1} parent=1 // pred_check_branch
      %165 = sbr.rel (0) target = $region25
    $region24: #{_net_forward_impl.1} parent=1 // pred_region
      %s167 = ssub.s32 256, 256
      %168 = vsyncadd [#allocation4], %s167
      %s169 = sshll.u32 [#allocation7], 4
      %s170 = int_to_ptr.vmem [resolvable:$true] %s169
      %175 = dma.vmem_to_hbm [thread:$0]  %s170, 256, %s3, [#allocation4], 128, 128, 8
    $region25: #{_net_forward_impl.1} parent=1 // pred_fallthru
      _
    // Predicated region
    $region26: #{_net_forward_impl.1} parent=1 // pred_check
      _
    $region27: #{_net_forward_impl.1} parent=1 // pred_check_branch
      %177 = sbr.rel (0) target = $region29
    $region28: #{_net_forward_impl.1} parent=1 // pred_region
      %178 = dma.done [#allocation4], 256
    $region29: #{_net_forward_impl.1} parent=1 // pred_fallthru
      _
    %179 = vsyncpa [#allocation3], 1
    %180 = vsyncpa [#allocation6], 1
    %181 = vsyncpa [#allocation4], 1

</llo_original>
